<compile_context>
chip_gen: v5e
topology: v5e:2x2
jax: 0.10.0
libtpu: 0.0.40
codegen_flags: <defaults>
</compile_context>

<pallas_src>
import math

import jax
import jax.numpy as jnp
from jax.experimental import pallas as pl
from jax.experimental.pallas import tpu as pltpu

NEG_SLOPE = 0.01  # torch.nn.LeakyReLU default


def _leaky_relu(x):
    return jnp.where(x > 0, x, NEG_SLOPE * x)


def _cem_kernel(x_ref, w1_ref, b1_ref, w2_ref, b2_ref,
                wp1_ref, bp1_ref, wp2_ref, rexp_ref, bp2_ref,
                emb_ref, pred_ref):
    # x_ref:    (BT, F)   f32   batch tile (resident across concept-tile steps)
    # w1_ref:   (F, cw)   bf16  packed generator layer 1 for this concept tile
    # b1_ref:   (1, cw)   f32
    # w2_ref:   (cw, cw)  bf16  block-diagonal generator layer 2 for this concept tile
    # b2_ref:   (1, cw)   f32
    # wp1_ref:  (cw, cw)  bf16  shared predictor layer 1, replicated block-diagonally
    # bp1_ref:  (1, cw)   f32
    # wp2_ref:  (cw, C)   bf16  shared predictor layer 2 -> one logit column per concept
    # rexp_ref: (C, C*E)  f32   exact 0/1 expander (prob -> its E embedding columns)
    # bp2_ref:  (1,)      f32   scalar bias in SMEM
    # emb_ref:  (BT, C*E) f32   c_emb slab for this (batch tile, concept tile)
    # pred_ref: (BT, C)   f32   c_pred for this (batch tile, concept tile)
    x = x_ref[...].astype(jnp.bfloat16)

    # Generator layer 1 over all concepts in the tile (lane-dense N = cw).
    h = jnp.dot(x, w1_ref[...], preferred_element_type=jnp.float32) + b1_ref[...]
    h = _leaky_relu(h)

    # Generator layer 2: block-diagonal per concept.  Packed column order is
    # [pos half of every concept | neg half of every concept].
    ctx = jnp.dot(h.astype(jnp.bfloat16), w2_ref[...],
                  preferred_element_type=jnp.float32) + b2_ref[...]
    ctx = _leaky_relu(ctx)                                   # (BT, cw) f32

    # Shared concept_prob_predictor applied to every concept's context in one matmul.
    p = jnp.dot(ctx.astype(jnp.bfloat16), wp1_ref[...],
                preferred_element_type=jnp.float32) + bp1_ref[...]
    p = _leaky_relu(p)                                       # (BT, cw) concept-major hidden

    logit = jnp.dot(p.astype(jnp.bfloat16), wp2_ref[...],
                    preferred_element_type=jnp.float32) + bp2_ref[0]
    pred = jax.nn.sigmoid(logit)                             # (BT, C) f32

    # Broadcast each concept probability across its E embedding columns.
    # Exact 0/1 weights kept in f32 (tiny matmul) so the blend weights stay full precision.
    pred_rep = jnp.dot(pred, rexp_ref[...], preferred_element_type=jnp.float32)  # (BT, C*E)

    half = pred_rep.shape[1]
    ctx_pos = ctx[:, :half]
    ctx_neg = ctx[:, half:]
    emb_ref[...] = ctx_neg + pred_rep * (ctx_pos - ctx_neg)   # FMA-form blend
    pred_ref[...] = pred


def _choose_concept_tiling(n_concepts, emb_size, cw_cap=256):
    """Returns (C, n_tiles, n_concepts_padded)."""
    two_e = 2 * emb_size
    if n_concepts * two_e <= cw_cap:
        # Single concept tile: output widths equal the full array dims -> always legal.
        return n_concepts, 1, n_concepts
    # Multi-tile: per-tile embedding width C*E must be a 128 multiple (lane-dense stores,
    # and required for a multi-tile output BlockSpec).
    c_lane = 128 // math.gcd(emb_size, 128)          # smallest C with (C*E) % 128 == 0
    c = max(c_lane, (cw_cap // (c_lane * two_e)) * c_lane)
    n_tiles = -(-n_concepts // c)
    return c, n_tiles, n_tiles * c


def _choose_batch_tiling(batch, bt_cap=512):
    """Returns (B_padded, B_tile, n_batch_tiles)."""
    if batch <= bt_cap:
        return batch, batch, 1
    bp = -(-batch // bt_cap) * bt_cap
    return bp, bt_cap, bp // bt_cap


def _pack_params(params, c_tile, n_concepts_padded):
    """Re-pack per-concept weights into tile-wide, lane-dense matrices (exact transform),
    casting the large weight streams to bf16."""
    W1, b1, W2, b2 = params["W1"], params["b1"], params["W2"], params["b2"]
    Wp1, bp1, Wp2, bp2 = params["Wp1"], params["bp1"], params["Wp2"], params["bp2"]
    n_concepts, F, two_e = W1.shape
    E = two_e // 2
    pad = n_concepts_padded - n_concepts
    if pad:
        W1 = jnp.pad(W1, ((0, pad), (0, 0), (0, 0)))
        b1 = jnp.pad(b1, ((0, pad), (0, 0)))
        W2 = jnp.pad(W2, ((0, pad), (0, 0), (0, 0)))
        b2 = jnp.pad(b2, ((0, pad), (0, 0)))
    C = c_tile
    n_tiles = n_concepts_padded // C
    cw = C * two_e
    eye = jnp.eye(C, dtype=jnp.float32)

    # Packed context column order per tile: col = h*C*E + c*E + j  (h: 0=pos / 1=neg).
    w1p = W1.reshape(n_tiles, C, F, 2, E).transpose(0, 2, 3, 1, 4).reshape(n_tiles, F, cw)
    b1p = b1.reshape(n_tiles, C, 2, E).transpose(0, 2, 1, 3).reshape(n_tiles, 1, cw)

    # Per-concept (2E,2E) second layer as a block-diagonal matrix in packed space.
    w2p = jnp.einsum("tcaibo,cd->tacibdo",
                     W2.reshape(n_tiles, C, 2, E, 2, E), eye).reshape(n_tiles, cw, cw)
    b2p = b2.reshape(n_tiles, C, 2, E).transpose(0, 2, 1, 3).reshape(n_tiles, 1, cw)

    # Shared predictor layer 1 replicated per concept: packed-ctx rows -> (concept, hidden) cols.
    wp1p = jnp.einsum("aik,cd->acidk", Wp1.reshape(2, E, two_e), eye).reshape(cw, cw)
    bp1p = jnp.tile(bp1, C).reshape(1, cw)

    # Shared predictor layer 2: one logit column per concept in the tile.
    wp2p = jnp.einsum("k,dc->dkc", Wp2[:, 0], eye).reshape(cw, C)

    # 0/1 expander: broadcasts pred[:, c] across that concept's E embedding columns.
    rexp = jnp.repeat(eye, E, axis=1)                        # (C, C*E), exact in f32

    bp2p = bp2.reshape(1)                                    # scalar -> SMEM

    bf = jnp.bfloat16
    return (w1p.astype(bf), b1p.astype(jnp.float32),
            w2p.astype(bf), b2p.astype(jnp.float32),
            wp1p.astype(bf), bp1p.astype(jnp.float32),
            wp2p.astype(bf), rexp.astype(jnp.float32), bp2p.astype(jnp.float32))


def concept_embedding_forward(x, params):
    """ConceptEmbedding forward.  x: (B, in_features) f32.
    Returns (c_emb, c_pred): (B, n_concepts, emb_size), (B, n_concepts)."""
    B, F = x.shape
    n_concepts, _, two_e = params["W1"].shape
    E = two_e // 2

    C, nct, n_concepts_p = _choose_concept_tiling(n_concepts, E)
    Bp, BT, nbt = _choose_batch_tiling(B)
    cw = C * two_e     # packed context width per concept tile
    ew = C * E         # packed embedding width per concept tile

    w1p, b1p, w2p, b2p, wp1p, bp1p, wp2p, rexp, bp2p = _pack_params(params, C, n_concepts_p)
    xp = x if Bp == B else jnp.pad(x, ((0, Bp - B), (0, 0)))

    # Advisory cost estimate for XLA's scheduler.
    flops = 2 * Bp * nct * (F * cw + 2 * cw * cw + cw * C + C * ew)
    bytes_accessed = int(
        xp.size * 4
        + nbt * (w1p.size * 2 + w2p.size * 2 + (b1p.size + b2p.size) * 4)
        + wp1p.size * 2 + wp2p.size * 2 + bp1p.size * 4 + rexp.size * 4 + 4
        + Bp * n_concepts_p * E * 4 + nct * Bp * C * 4)
    cost = pl.CostEstimate(flops=int(flops), transcendentals=int(Bp * n_concepts_p),
                           bytes_accessed=bytes_accessed)

    # VMEM budget: double-buffered streamed tiles + resident shared weights + f32
    # intermediates, sized against v7x's 64 MiB physical VMEM.
    streamed = (BT * F * 4 + F * cw * 2 + cw * cw * 2 + 2 * cw * 4
                + BT * ew * 4 + BT * C * 4)
    resident = cw * cw * 2 + cw * 4 + cw * C * 2 + C * ew * 4
    interm = 6 * BT * cw * 4
    vmem_est = 2 * streamed + resident + interm
    vmem_limit = int(min(60 * 1024 * 1024, max(32 * 1024 * 1024, 2 * vmem_est)))

    emb_out, pred_out = pl.pallas_call(
        _cem_kernel,
        out_shape=(
            jax.ShapeDtypeStruct((Bp, n_concepts_p * E), jnp.float32),
            jax.ShapeDtypeStruct((nct, Bp, C), jnp.float32),
        ),
        grid_spec=pltpu.PrefetchScalarGridSpec(
            num_scalar_prefetch=0,
            grid=(nbt, nct),
            in_specs=[
                pl.BlockSpec((BT, F), lambda b, t: (b, 0)),              # x batch tile
                pl.BlockSpec((None, F, cw), lambda b, t: (t, 0, 0)),     # W1 packed (bf16)
                pl.BlockSpec((None, 1, cw), lambda b, t: (t, 0, 0)),     # b1 packed
                pl.BlockSpec((None, cw, cw), lambda b, t: (t, 0, 0)),    # W2 block-diag (bf16)
                pl.BlockSpec((None, 1, cw), lambda b, t: (t, 0, 0)),     # b2 packed
                pl.BlockSpec((cw, cw), lambda b, t: (0, 0)),             # Wp1 block-diag (bf16)
                pl.BlockSpec((1, cw), lambda b, t: (0, 0)),              # bp1 packed
                pl.BlockSpec((cw, C), lambda b, t: (0, 0)),              # Wp2 columns (bf16)
                pl.BlockSpec((C, ew), lambda b, t: (0, 0)),              # prob expander (f32)
                pl.BlockSpec(memory_space=pltpu.MemorySpace.SMEM),       # bp2 scalar
            ],
            out_specs=[
                pl.BlockSpec((BT, ew), lambda b, t: (b, t)),             # c_emb slab
                pl.BlockSpec((None, BT, C), lambda b, t: (t, b, 0)),     # c_pred tile
            ],
        ),
        compiler_params=pltpu.CompilerParams(
            # Batch tiles and concept tiles are fully independent -> both axes parallel
            # (shards across both TensorCores on v7x; no-op on single-TC v5e/v6e).
            dimension_semantics=("parallel", "parallel"),
            vmem_limit_bytes=vmem_limit),
        cost_estimate=cost,
    )(xp, w1p, b1p, w2p, b2p, wp1p, bp1p, wp2p, rexp, bp2p)

    # Kernel wrote the final column order: contiguous reshape + (possible) pad slicing only.
    c_emb = emb_out.reshape(Bp, n_concepts_p, E)[:B, :n_concepts]
    c_pred = jnp.transpose(pred_out, (1, 0, 2)).reshape(Bp, n_concepts_p)[:B, :n_concepts]
    return c_emb, c_pred


def _reference_forward(x, params):
    """Pure-JAX f32 reference mirroring the PyTorch module."""
    W1, b1, W2, b2 = params["W1"], params["b1"], params["W2"], params["b2"]
    Wp1, bp1, Wp2, bp2 = params["Wp1"], params["bp1"], params["Wp2"], params["bp2"]
    n_concepts = W1.shape[0]
    E = W1.shape[2] // 2
    embs, preds = [], []
    for i in range(n_concepts):
        h = _leaky_relu(x @ W1[i] + b1[i])
        ctx = _leaky_relu(h @ W2[i] + b2[i])
        p = _leaky_relu(ctx @ Wp1 + bp1)
        logit = p @ Wp2 + bp2
        c_pred = jax.nn.sigmoid(logit)                      # (B, 1)
        c_emb = ctx[:, :E] * c_pred + ctx[:, E:] * (1.0 - c_pred)
        embs.append(c_emb[:, None, :])
        preds.append(c_pred)
    return jnp.concatenate(embs, axis=1), jnp.concatenate(preds, axis=1)


def _init_params(key, in_features, n_concepts, emb_size):
    two_e = 2 * emb_size
    ks = jax.random.split(key, 8)
    scale = 0.1
    return {
        "W1": scale * jax.random.normal(ks[0], (n_concepts, in_features, two_e), jnp.float32),
        "b1": scale * jax.random.normal(ks[1], (n_concepts, two_e), jnp.float32),
        "W2": scale * jax.random.normal(ks[2], (n_concepts, two_e, two_e), jnp.float32),
        "b2": scale * jax.random.normal(ks[3], (n_concepts, two_e), jnp.float32),
        "Wp1": scale * jax.random.normal(ks[4], (two_e, two_e), jnp.float32),
        "bp1": scale * jax.random.normal(ks[5], (two_e,), jnp.float32),
        "Wp2": scale * jax.random.normal(ks[6], (two_e, 1), jnp.float32),
        "bp2": scale * jax.random.normal(ks[7], (1,), jnp.float32),
    }


if __name__ == "__main__":
    B, in_features, n_concepts, emb_size = 8, 32, 4, 16

    key = jax.random.PRNGKey(0)
    kx, kp = jax.random.split(key)
    x = jax.random.normal(kx, (B, in_features), jnp.float32)
    params = _init_params(kp, in_features, n_concepts, emb_size)

    fwd = jax.jit(concept_embedding_forward)
    c_emb, c_pred = fwd(x, params)
    jax.block_until_ready((c_emb, c_pred))

    ref_emb, ref_pred = _reference_forward(x, params)
    assert c_emb.shape == (B, n_concepts, emb_size)
    assert c_pred.shape == (B, n_concepts)
    # bf16 weight streams -> ~1e-2 relative error vs the f32 reference is expected.
    assert jnp.allclose(c_emb, ref_emb, atol=5e-2, rtol=5e-2)
    assert jnp.allclose(c_pred, ref_pred, atol=5e-2, rtol=5e-2)

    print("KERNEL_OK")
</pallas_src>

<mosaic_0001>
module attributes {stable_mosaic.version = 11 : i64} {
  func.func @_cem_kernel(%arg0: i32, %arg1: i32, %arg2: memref<8x32xf32, #tpu.memory_space<vmem>>, %arg3: memref<1x32x128xbf16, #tpu.memory_space<vmem>>, %arg4: memref<1x1x128xf32, #tpu.memory_space<vmem>>, %arg5: memref<1x128x128xbf16, #tpu.memory_space<vmem>>, %arg6: memref<1x1x128xf32, #tpu.memory_space<vmem>>, %arg7: memref<128x128xbf16, #tpu.memory_space<vmem>>, %arg8: memref<1x128xf32, #tpu.memory_space<vmem>>, %arg9: memref<128x4xbf16, #tpu.memory_space<vmem>>, %arg10: memref<4x64xf32, #tpu.memory_space<vmem>>, %arg11: memref<1xf32, #tpu.memory_space<smem>>, %arg12: memref<8x64xf32, #tpu.memory_space<vmem>>, %arg13: memref<1x8x4xf32, #tpu.memory_space<vmem>>) attributes {dimension_semantics = [#tpu.dimension_semantics<parallel>, #tpu.dimension_semantics<parallel>], iteration_bounds = array<i64: 1, 1>, scalar_prefetch = 0 : i64, scratch_operands = 0 : i64, tpu.core_type = #tpu.core_type<tc>, window_params = [{transform_indices = @transform_0, window_bounds = array<i64: 8, 32>}, {transform_indices = @transform_1, window_bounds = array<i64: 1, 32, 128>}, {transform_indices = @transform_2, window_bounds = array<i64: 1, 1, 128>}, {transform_indices = @transform_3, window_bounds = array<i64: 1, 128, 128>}, {transform_indices = @transform_4, window_bounds = array<i64: 1, 1, 128>}, {pipeline_mode = #tpu.pipeline_mode<synchronous>, transform_indices = @transform_5, window_bounds = array<i64: 128, 128>}, {pipeline_mode = #tpu.pipeline_mode<synchronous>, transform_indices = @transform_6, window_bounds = array<i64: 1, 128>}, {pipeline_mode = #tpu.pipeline_mode<synchronous>, transform_indices = @transform_7, window_bounds = array<i64: 128, 4>}, {pipeline_mode = #tpu.pipeline_mode<synchronous>, transform_indices = @transform_8, window_bounds = array<i64: 4, 64>}, {transform_indices = @transform_9, window_bounds = array<i64: 1>}, {transform_indices = @transform_10, window_bounds = array<i64: 8, 64>}, {transform_indices = @transform_11, window_bounds = array<i64: 1, 8, 4>}]} {
    %c0 = arith.constant 0 : index
    %c0_0 = arith.constant 0 : index
    %0 = vector.load %arg2[%c0, %c0_0] : memref<8x32xf32, #tpu.memory_space<vmem>>, vector<8x32xf32>
    %1 = arith.truncf %0 : vector<8x32xf32> to vector<8x32xbf16>
    %c0_1 = arith.constant 0 : index
    %c0_2 = arith.constant 0 : index
    %c0_3 = arith.constant 0 : index
    %2 = vector.load %arg3[%c0_1, %c0_2, %c0_3] : memref<1x32x128xbf16, #tpu.memory_space<vmem>>, vector<1x32x128xbf16>
    %3 = vector.shape_cast %2 : vector<1x32x128xbf16> to vector<32x128xbf16>
    %cst = arith.constant dense<0.000000e+00> : vector<8x128xf32>
    %4 = tpu.matmul %1, %3, %cst {dimension_numbers = #tpu.dot_dimension_numbers<[1], [0], [0], [1], [0, 0, 1, 1], [], []>} : vector<8x32xbf16>, vector<32x128xbf16>, vector<8x128xf32> -> vector<8x128xf32>
    %c0_4 = arith.constant 0 : index
    %c0_5 = arith.constant 0 : index
    %c0_6 = arith.constant 0 : index
    %5 = vector.load %arg4[%c0_4, %c0_5, %c0_6] : memref<1x1x128xf32, #tpu.memory_space<vmem>>, vector<1x1x128xf32>
    %6 = vector.shape_cast %5 : vector<1x1x128xf32> to vector<1x128xf32>
    %7 = vector.broadcast %6 : vector<1x128xf32> to vector<8x128xf32>
    %8 = arith.addf %4, %7 : vector<8x128xf32>
    %cst_7 = arith.constant 0.000000e+00 : f32
    %9 = vector.broadcast %cst_7 : f32 to vector<8x128xf32>
    %10 = arith.cmpf ogt, %8, %9 : vector<8x128xf32>
    %cst_8 = arith.constant 0.00999999977 : f32
    %11 = vector.broadcast %cst_8 : f32 to vector<8x128xf32>
    %12 = arith.mulf %11, %8 : vector<8x128xf32>
    %13 = arith.select %10, %8, %12 : vector<8x128xi1>, vector<8x128xf32>
    %14 = arith.truncf %13 : vector<8x128xf32> to vector<8x128xbf16>
    %c0_9 = arith.constant 0 : index
    %c0_10 = arith.constant 0 : index
    %c0_11 = arith.constant 0 : index
    %15 = vector.load %arg5[%c0_9, %c0_10, %c0_11] : memref<1x128x128xbf16, #tpu.memory_space<vmem>>, vector<1x128x128xbf16>
    %16 = vector.shape_cast %15 : vector<1x128x128xbf16> to vector<128x128xbf16>
    %cst_12 = arith.constant dense<0.000000e+00> : vector<8x128xf32>
    %17 = tpu.matmul %14, %16, %cst_12 {dimension_numbers = #tpu.dot_dimension_numbers<[1], [0], [0], [1], [0, 0, 1, 1], [], []>} : vector<8x128xbf16>, vector<128x128xbf16>, vector<8x128xf32> -> vector<8x128xf32>
    %c0_13 = arith.constant 0 : index
    %c0_14 = arith.constant 0 : index
    %c0_15 = arith.constant 0 : index
    %18 = vector.load %arg6[%c0_13, %c0_14, %c0_15] : memref<1x1x128xf32, #tpu.memory_space<vmem>>, vector<1x1x128xf32>
    %19 = vector.shape_cast %18 : vector<1x1x128xf32> to vector<1x128xf32>
    %20 = vector.broadcast %19 : vector<1x128xf32> to vector<8x128xf32>
    %21 = arith.addf %17, %20 : vector<8x128xf32>
    %cst_16 = arith.constant 0.000000e+00 : f32
    %22 = vector.broadcast %cst_16 : f32 to vector<8x128xf32>
    %23 = arith.cmpf ogt, %21, %22 : vector<8x128xf32>
    %cst_17 = arith.constant 0.00999999977 : f32
    %24 = vector.broadcast %cst_17 : f32 to vector<8x128xf32>
    %25 = arith.mulf %24, %21 : vector<8x128xf32>
    %26 = arith.select %23, %21, %25 : vector<8x128xi1>, vector<8x128xf32>
    %27 = arith.truncf %26 : vector<8x128xf32> to vector<8x128xbf16>
    %c0_18 = arith.constant 0 : index
    %c0_19 = arith.constant 0 : index
    %28 = vector.load %arg7[%c0_18, %c0_19] : memref<128x128xbf16, #tpu.memory_space<vmem>>, vector<128x128xbf16>
    %cst_20 = arith.constant dense<0.000000e+00> : vector<8x128xf32>
    %29 = tpu.matmul %27, %28, %cst_20 {dimension_numbers = #tpu.dot_dimension_numbers<[1], [0], [0], [1], [0, 0, 1, 1], [], []>} : vector<8x128xbf16>, vector<128x128xbf16>, vector<8x128xf32> -> vector<8x128xf32>
    %c0_21 = arith.constant 0 : index
    %c0_22 = arith.constant 0 : index
    %30 = vector.load %arg8[%c0_21, %c0_22] : memref<1x128xf32, #tpu.memory_space<vmem>>, vector<1x128xf32>
    %31 = vector.broadcast %30 : vector<1x128xf32> to vector<8x128xf32>
    %32 = arith.addf %29, %31 : vector<8x128xf32>
    %cst_23 = arith.constant 0.000000e+00 : f32
    %33 = vector.broadcast %cst_23 : f32 to vector<8x128xf32>
    %34 = arith.cmpf ogt, %32, %33 : vector<8x128xf32>
    %cst_24 = arith.constant 0.00999999977 : f32
    %35 = vector.broadcast %cst_24 : f32 to vector<8x128xf32>
    %36 = arith.mulf %35, %32 : vector<8x128xf32>
    %37 = arith.select %34, %32, %36 : vector<8x128xi1>, vector<8x128xf32>
    %38 = arith.truncf %37 : vector<8x128xf32> to vector<8x128xbf16>
    %c0_25 = arith.constant 0 : index
    %c0_26 = arith.constant 0 : index
    %39 = vector.load %arg9[%c0_25, %c0_26] : memref<128x4xbf16, #tpu.memory_space<vmem>>, vector<128x4xbf16>
    %cst_27 = arith.constant dense<0.000000e+00> : vector<8x4xf32>
    %40 = tpu.matmul %38, %39, %cst_27 {dimension_numbers = #tpu.dot_dimension_numbers<[1], [0], [0], [1], [0, 0, 1, 1], [], []>} : vector<8x128xbf16>, vector<128x4xbf16>, vector<8x4xf32> -> vector<8x4xf32>
    %c0_28 = arith.constant 0 : index
    %41 = memref.load %arg11[%c0_28] : memref<1xf32, #tpu.memory_space<smem>>
    %42 = vector.broadcast %41 : f32 to vector<8x4xf32>
    %43 = arith.addf %40, %42 : vector<8x4xf32>
    %44 = arith.negf %43 : vector<8x4xf32>
    %45 = math.exp %44 : vector<8x4xf32>
    %cst_29 = arith.constant 1.000000e+00 : f32
    %46 = vector.broadcast %cst_29 : f32 to vector<8x4xf32>
    %47 = arith.addf %46, %45 : vector<8x4xf32>
    %48 = arith.divf %46, %47 : vector<8x4xf32>
    %c0_30 = arith.constant 0 : index
    %c0_31 = arith.constant 0 : index
    %49 = vector.load %arg10[%c0_30, %c0_31] : memref<4x64xf32, #tpu.memory_space<vmem>>, vector<4x64xf32>
    %cst_32 = arith.constant dense<0.000000e+00> : vector<8x64xf32>
    %50 = tpu.matmul %48, %49, %cst_32 {dimension_numbers = #tpu.dot_dimension_numbers<[1], [0], [0], [1], [0, 0, 1, 1], [], []>} : vector<8x4xf32>, vector<4x64xf32>, vector<8x64xf32> -> vector<8x64xf32>
    %51 = vector.extract_strided_slice %26 {offsets = [0, 0], sizes = [8, 64], strides = [1, 1]} : vector<8x128xf32> to vector<8x64xf32>
    %52 = vector.extract_strided_slice %26 {offsets = [0, 64], sizes = [8, 64], strides = [1, 1]} : vector<8x128xf32> to vector<8x64xf32>
    %53 = arith.subf %51, %52 : vector<8x64xf32>
    %54 = arith.mulf %50, %53 : vector<8x64xf32>
    %55 = arith.addf %52, %54 : vector<8x64xf32>
    %c0_33 = arith.constant 0 : index
    %c0_34 = arith.constant 0 : index
    %56 = vector.load %arg12[%c0_33, %c0_34] : memref<8x64xf32, #tpu.memory_space<vmem>>, vector<8x64xf32>
    tpu.vector_store %arg12[%c0_33, %c0_34], %55 {strides = array<i32>} : memref<8x64xf32, #tpu.memory_space<vmem>>, vector<8x64xf32>,
    %c0_35 = arith.constant 0 : index
    %c0_36 = arith.constant 0 : index
    %c0_37 = arith.constant 0 : index
    %57 = vector.load %arg13[%c0_35, %c0_36, %c0_37] : memref<1x8x4xf32, #tpu.memory_space<vmem>>, vector<1x8x4xf32>
    %58 = vector.shape_cast %57 : vector<1x8x4xf32> to vector<8x4xf32>
    %59 = vector.shape_cast %48 : vector<8x4xf32> to vector<1x8x4xf32>
    tpu.vector_store %arg13[%c0_35, %c0_36, %c0_37], %59 {strides = array<i32>} : memref<1x8x4xf32, #tpu.memory_space<vmem>>, vector<1x8x4xf32>,
    return
  }
  func.func @transform_0(%arg0: i32, %arg1: i32) -> (i32, i32) {
    %c0_i32 = arith.constant 0 : i32
    %c0_i32_0 = arith.constant 0 : i32
    return %arg0, %c0_i32 : i32, i32
  }
  func.func @transform_1(%arg0: i32, %arg1: i32) -> (i32, i32, i32) {
    %c0_i32 = arith.constant 0 : i32
    %c0_i32_0 = arith.constant 0 : i32
    %c0_i32_1 = arith.constant 0 : i32
    return %arg1, %c0_i32, %c0_i32_0 : i32, i32, i32
  }
  func.func @transform_2(%arg0: i32, %arg1: i32) -> (i32, i32, i32) {
    %c0_i32 = arith.constant 0 : i32
    %c0_i32_0 = arith.constant 0 : i32
    %c0_i32_1 = arith.constant 0 : i32
    return %arg1, %c0_i32, %c0_i32_0 : i32, i32, i32
  }
  func.func @transform_3(%arg0: i32, %arg1: i32) -> (i32, i32, i32) {
    %c0_i32 = arith.constant 0 : i32
    %c0_i32_0 = arith.constant 0 : i32
    %c0_i32_1 = arith.constant 0 : i32
    return %arg1, %c0_i32, %c0_i32_0 : i32, i32, i32
  }
  func.func @transform_4(%arg0: i32, %arg1: i32) -> (i32, i32, i32) {
    %c0_i32 = arith.constant 0 : i32
    %c0_i32_0 = arith.constant 0 : i32
    %c0_i32_1 = arith.constant 0 : i32
    return %arg1, %c0_i32, %c0_i32_0 : i32, i32, i32
  }
  func.func @transform_5(%arg0: i32, %arg1: i32) -> (i32, i32) {
    %c0_i32 = arith.constant 0 : i32
    %c0_i32_0 = arith.constant 0 : i32
    %c0_i32_1 = arith.constant 0 : i32
    return %c0_i32, %c0_i32_0 : i32, i32
  }
  func.func @transform_6(%arg0: i32, %arg1: i32) -> (i32, i32) {
    %c0_i32 = arith.constant 0 : i32
    %c0_i32_0 = arith.constant 0 : i32
    %c0_i32_1 = arith.constant 0 : i32
    return %c0_i32, %c0_i32_0 : i32, i32
  }
  func.func @transform_7(%arg0: i32, %arg1: i32) -> (i32, i32) {
    %c0_i32 = arith.constant 0 : i32
    %c0_i32_0 = arith.constant 0 : i32
    %c0_i32_1 = arith.constant 0 : i32
    return %c0_i32, %c0_i32_0 : i32, i32
  }
  func.func @transform_8(%arg0: i32, %arg1: i32) -> (i32, i32) {
    %c0_i32 = arith.constant 0 : i32
    %c0_i32_0 = arith.constant 0 : i32
    %c0_i32_1 = arith.constant 0 : i32
    return %c0_i32, %c0_i32_0 : i32, i32
  }
  func.func @transform_9(%arg0: i32, %arg1: i32) -> i32 {
    %c0_i32 = arith.constant 0 : i32
    %c0_i32_0 = arith.constant 0 : i32
    return %c0_i32 : i32
  }
  func.func @transform_10(%arg0: i32, %arg1: i32) -> (i32, i32) {
    %c0_i32 = arith.constant 0 : i32
    return %arg0, %arg1 : i32, i32
  }
  func.func @transform_11(%arg0: i32, %arg1: i32) -> (i32, i32, i32) {
    %c0_i32 = arith.constant 0 : i32
    %c0_i32_0 = arith.constant 0 : i32
    return %arg1, %arg0, %c0_i32 : i32, i32, i32
  }
}

</mosaic_0001>

<llo_original>
// kernel: tile.8
$region0: #{tile.8}
  #allocation0 [shape = 's32[1]{0}', space=sflag, size = 0x4, scoped, tag = 'scoped memory for tile.8']
  %s0 = inlined_call_operand.vmem [shape: f32[32], index: 0, kind: input, shape index: {}]
  %s1 = inlined_call_operand.vmem [shape: f32[4,32], index: 1, kind: output, shape index: {}]
  // Predicated region
  $region2: #{tile.8} parent=0 // pred_check
    _
  $region3: #{tile.8} parent=0 // pred_check_branch
    %3 = sbr.rel (0) target = $region5
  $region4: #{tile.8} parent=0 // pred_region
    _
  $region5: #{tile.8} parent=0 // pred_fallthru
    _
  %v4 = vld [vmem:[%s0] ss:$0 sm:$0xff]
  %5 = vst [vmem:[%s1] sm:$0xf] %v4

// kernel: tile.9
$region0: #{tile.9}
  %s0 = inlined_call_operand.vmem [shape: f32[4,32], index: 0, kind: input, shape index: {}]
  %s1 = inlined_call_operand.vmem [shape: f32[1,128], index: 1, kind: output, shape index: {}]
  $region1: #{tile.9} parent=0
    #allocation0 [shape = 'u8[4096]{0}', space=vmem, size = 0x1000, scoped, tag = 'scoped mem for output reshape']
    #allocation1 [shape = 'u8[4096]{0}', space=vmem, size = 0x1000, scoped, tag = 'scoped mem for input reshape']
    %s3 = ssub.s32 16, 1
    %v4 = vld [vmem:[%s0] sm:%s3]
    %5 = vst [vmem:[#allocation1] sm:%s3] %v4
    %v6 = vld [vmem:[#allocation1] sm:$0x1]
    %vm7 = vcmask 261120
    %8 = vst.msk [vmem:[#allocation0] sm:$0x1] %vm7, %v6
    %s9 = scalar_lea.vmem [#allocation1], 3
    %v10 = vld [vmem:[%s9] sm:$0x1]
    %11 = vrot.lane.b32.xlu0 %v10, 96
    %v12 = vpop.permute.xlu0 %11
    %vm13 = vcmask 1048320
    %14 = vst.msk [vmem:[#allocation0] sm:$0x1] %vm13, %v12
    %s15 = scalar_lea.vmem [#allocation1], 2
    %v16 = vld [vmem:[%s15] sm:$0x1]
    %17 = vrot.lane.b32.xlu0 %v16, 64
    %v18 = vpop.permute.xlu0 %17
    %vm19 = vcmask 785920
    %20 = vst.msk [vmem:[#allocation0] sm:$0x1] %vm19, %v18
    %s21 = scalar_lea.vmem [#allocation1], 1
    %v22 = vld [vmem:[%s21] sm:$0x1]
    %23 = vrot.lane.b32.xlu0 %v22, 32
    %v24 = vpop.permute.xlu0 %23
    %vm25 = vcmask 523520
    %26 = vst.msk [vmem:[#allocation0] sm:$0x1] %vm25, %v24
    %s28 = ssub.s32 2, 1
    %v29 = vld [vmem:[#allocation0] sm:%s28]
    %s31 = ssub.s32 2, 1
    %32 = vst [vmem:[%s1] sm:%s31] %v29

// kernel: concept_embedding_forward.1
$region0: #{concept_embedding_forward.1}
  #allocation0 [shape = 'u32[]', space=smem, size = 0x4, offset = 0x4, fixed_abs, tag = 'smem constant byte address 0x4 - core index']
  #allocation1 [shape = 'u32[72,128]{1,0:T(1,128)}', space=vmem, size = 0x9000, scoped, tag = 'internal scratch']
  #allocation2 [shape = 'f32[1]{0:T(128)S(6)}', space=smem, size = 0x200, scoped, tag = 'scoped memory for concept_embedding_forward.1']
  %s0 = inlined_call_operand.vmem [shape: f32[8,32], index: 0, kind: input, shape index: {}]
  %s1 = inlined_call_operand.vmem [shape: bf16[1,32,128], index: 1, kind: input, shape index: {}]
  %s2 = inlined_call_operand.vmem [shape: f32[1,1,128], index: 2, kind: input, shape index: {}]
  %s3 = inlined_call_operand.vmem [shape: bf16[1,128,128], index: 3, kind: input, shape index: {}]
  %s4 = inlined_call_operand.vmem [shape: f32[1,1,128], index: 4, kind: input, shape index: {}]
  %s5 = inlined_call_operand.vmem [shape: bf16[128,128], index: 5, kind: input, shape index: {}]
  %s6 = inlined_call_operand.vmem [shape: f32[1,128], index: 6, kind: input, shape index: {}]
  %s7 = inlined_call_operand.vmem [shape: bf16[128,4], index: 7, kind: input, shape index: {}]
  %s8 = inlined_call_operand.vmem [shape: f32[4,64], index: 8, kind: input, shape index: {}]
  %s9 = inlined_call_operand.<no memory space> [shape: f32[1], index: 9, kind: input, shape index: {}]
  %s10 = inlined_call_operand.vmem [shape: f32[8,64], index: 10, kind: output, shape index: {0}]
  %s11 = inlined_call_operand.vmem [shape: f32[1,8,4], index: 11, kind: output, shape index: {1}]
  %12 = xla_tuple %s10, %s11
  %s13 = sld [smem:[#allocation0]]
  $region58: #{concept_embedding_forward.1} parent=0
    _
  %s15 = ssub.s32 1, %s13
  %s16 = scalar_select 0, %s15, %s13
  %17 = sst [smem:[#allocation2]] %s9
  // Predicated region
  $region2: #{concept_embedding_forward.1} parent=0 // pred_check
    _
  $region3: #{concept_embedding_forward.1} parent=0 // pred_check_branch
    %19 = sbr.rel (0) target = $region5
  $region4: #{concept_embedding_forward.1} parent=0 // pred_region
    _
  $region5: #{concept_embedding_forward.1} parent=0 // pred_fallthru
    _
  // Predicated region
  $region6: #{concept_embedding_forward.1} parent=0 // pred_check
    _
  $region7: #{concept_embedding_forward.1} parent=0 // pred_check_branch
    %21 = sbr.rel (0) target = $region9
  $region8: #{concept_embedding_forward.1} parent=0 // pred_region
    _
  $region9: #{concept_embedding_forward.1} parent=0 // pred_fallthru
    _
  // Predicated region
  $region10: #{concept_embedding_forward.1} parent=0 // pred_check
    _
  $region11: #{concept_embedding_forward.1} parent=0 // pred_check_branch
    %23 = sbr.rel (0) target = $region13
  $region12: #{concept_embedding_forward.1} parent=0 // pred_region
    _
  $region13: #{concept_embedding_forward.1} parent=0 // pred_fallthru
    _
  // Predicated region
  $region14: #{concept_embedding_forward.1} parent=0 // pred_check
    _
  $region15: #{concept_embedding_forward.1} parent=0 // pred_check_branch
    %25 = sbr.rel (0) target = $region17
  $region16: #{concept_embedding_forward.1} parent=0 // pred_region
    _
  $region17: #{concept_embedding_forward.1} parent=0 // pred_fallthru
    _
  // Predicated region
  $region18: #{concept_embedding_forward.1} parent=0 // pred_check
    _
  $region19: #{concept_embedding_forward.1} parent=0 // pred_check_branch
    %27 = sbr.rel (0) target = $region21
  $region20: #{concept_embedding_forward.1} parent=0 // pred_region
    _
  $region21: #{concept_embedding_forward.1} parent=0 // pred_fallthru
    _
  // Predicated region
  $region22: #{concept_embedding_forward.1} parent=0 // pred_check
    _
  $region23: #{concept_embedding_forward.1} parent=0 // pred_check_branch
    %29 = sbr.rel (0) target = $region25
  $region24: #{concept_embedding_forward.1} parent=0 // pred_region
    _
  $region25: #{concept_embedding_forward.1} parent=0 // pred_fallthru
    _
  // Predicated region
  $region26: #{concept_embedding_forward.1} parent=0 // pred_check
    _
  $region27: #{concept_embedding_forward.1} parent=0 // pred_check_branch
    %31 = sbr.rel (0) target = $region29
  $region28: #{concept_embedding_forward.1} parent=0 // pred_region
    _
  $region29: #{concept_embedding_forward.1} parent=0 // pred_fallthru
    _
  // Predicated region
  $region30: #{concept_embedding_forward.1} parent=0 // pred_check
    _
  $region31: #{concept_embedding_forward.1} parent=0 // pred_check_branch
    %33 = sbr.rel (0) target = $region33
  $region32: #{concept_embedding_forward.1} parent=0 // pred_region
    _
  $region33: #{concept_embedding_forward.1} parent=0 // pred_fallthru
    _
  // Predicated region
  $region34: #{concept_embedding_forward.1} parent=0 // pred_check
    _
  $region35: #{concept_embedding_forward.1} parent=0 // pred_check_branch
    %35 = sbr.rel (0) target = $region37
  $region36: #{concept_embedding_forward.1} parent=0 // pred_region
    _
  $region37: #{concept_embedding_forward.1} parent=0 // pred_fallthru
    _
  // Predicated region
  $region38: #{concept_embedding_forward.1} parent=0 // pred_check
    _
  $region39: #{concept_embedding_forward.1} parent=0 // pred_check_branch
    %37 = sbr.rel (0) target = $region41
  $region40: #{concept_embedding_forward.1} parent=0 // pred_region
    _
  $region41: #{concept_embedding_forward.1} parent=0 // pred_fallthru
    _
  %v39 = vld [vmem:[%s0] sm:$0xff]
  %v40 = vpack.c.bf16 %v39, %v39
  %v41 = vld [vmem:[%s1] sm:$0xf]
  %v42 = vld [vmem:[%s1 + $0x4] sm:$0xf]
  %v43 = vld [vmem:[%s1 + $0x8] sm:$0xf]
  %v44 = vld [vmem:[%s1 + $0xc] sm:$0xf]
  %v45 = vld [vmem:[%s2] sm:$0x1]
  %v47 = vperm.slane %v45, 0
  %v53 = vunpack.c.l.b16 %v41
  %v54 = vunpack.c.l.b16 %v42
  %v55 = vunpack.c.l.b16 %v43
  %v56 = vunpack.c.l.b16 %v44
  %v57 = vpack.c.b16 %v54, %v53
  %v58 = vpack.c.b16 %v56, %v55
  %vm61 = vcmask 261120
  %v63 = vsel %vm61, %v40, 0
  %65 = vmatpush.bf16.msra.mxu0 0
  %66 = vmatpush.bf16.msra.mxu0 0
  %67 = vmatpush.bf16.msra.mxu0 0
  %68 = vmatpush.bf16.msra.mxu0 0
  %69 = vmatpush.bf16.msra.mxu0 0
  %70 = vmatpush.bf16.msra.mxu0 0
  %71 = vmatpush.bf16.msra.mxu0 %v58
  %72 = vmatpush.bf16.msra.mxu0 %v57
  %73 = vmatmul.bf16.gmra.mxu0 %v63
  %v74 = vpop.f32.mrf.mxu0
  %v75 = vadd.f32 %v47, %v74
  %v76 = vpop.f32.mrf.mxu0
  %77 = vdwg.mxu0
  %vm78 = vcmp.gt.f32.partialorder %v75, 0.0
  %v79 = vmul.f32 %v75, 0.01
  %v80 = vsel %vm78, %v75, %v79
  %v81 = vpack.c.bf16 %v80, %v80
  %v82 = vld [vmem:[%s3] sm:$0xf]
  %v83 = vld [vmem:[%s3 + $0x4] sm:$0xf]
  %v84 = vld [vmem:[%s3 + $0x8] sm:$0xf]
  %v85 = vld [vmem:[%s3 + $0xc] sm:$0xf]
  %v86 = vld [vmem:[%s3 + $0x10] sm:$0xf]
  %v87 = vld [vmem:[%s3 + $0x14] sm:$0xf]
  %v88 = vld [vmem:[%s3 + $0x18] sm:$0xf]
  %v89 = vld [vmem:[%s3 + $0x1c] sm:$0xf]
  %v90 = vld [vmem:[%s3 + $0x20] sm:$0xf]
  %v91 = vld [vmem:[%s3 + $0x24] sm:$0xf]
  %v92 = vld [vmem:[%s3 + $0x28] sm:$0xf]
  %v93 = vld [vmem:[%s3 + $0x2c] sm:$0xf]
  %v94 = vld [vmem:[%s3 + $0x30] sm:$0xf]
  %v95 = vld [vmem:[%s3 + $0x34] sm:$0xf]
  %v96 = vld [vmem:[%s3 + $0x38] sm:$0xf]
  %v97 = vld [vmem:[%s3 + $0x3c] sm:$0xf]
  %v98 = vld [vmem:[%s4] sm:$0x1]
  %v100 = vperm.slane %v98, 0
  %v118 = vunpack.c.l.b16 %v82
  %v119 = vunpack.c.l.b16 %v83
  %v120 = vunpack.c.l.b16 %v84
  %v121 = vunpack.c.l.b16 %v85
  %v122 = vunpack.c.l.b16 %v86
  %v123 = vunpack.c.l.b16 %v87
  %v124 = vunpack.c.l.b16 %v88
  %v125 = vunpack.c.l.b16 %v89
  %v126 = vunpack.c.l.b16 %v90
  %v127 = vunpack.c.l.b16 %v91
  %v128 = vunpack.c.l.b16 %v92
  %v129 = vunpack.c.l.b16 %v93
  %v130 = vunpack.c.l.b16 %v94
  %v131 = vunpack.c.l.b16 %v95
  %v132 = vunpack.c.l.b16 %v96
  %v133 = vunpack.c.l.b16 %v97
  %v134 = vpack.c.b16 %v119, %v118
  %v135 = vpack.c.b16 %v121, %v120
  %v136 = vpack.c.b16 %v123, %v122
  %v137 = vpack.c.b16 %v125, %v124
  %v138 = vpack.c.b16 %v127, %v126
  %v139 = vpack.c.b16 %v129, %v128
  %v140 = vpack.c.b16 %v131, %v130
  %v141 = vpack.c.b16 %v133, %v132
  %150 = vmatpush.bf16.msra.mxu0 %v141
  %151 = vmatpush.bf16.msra.mxu0 %v140
  %152 = vmatpush.bf16.msra.mxu0 %v139
  %153 = vmatpush.bf16.msra.mxu0 %v138
  %154 = vmatpush.bf16.msra.mxu0 %v137
  %155 = vmatpush.bf16.msra.mxu0 %v136
  %156 = vmatpush.bf16.msra.mxu0 %v135
  %157 = vmatpush.bf16.msra.mxu0 %v134
  %158 = vmatmul.bf16.gmra.mxu0 %v81
  %v159 = vpop.f32.mrf.mxu0
  %v160 = vadd.f32 %v100, %v159
  %v161 = vpop.f32.mrf.mxu0
  %162 = vdwg.mxu0
  %vm163 = vcmp.gt.f32.partialorder %v160, 0.0
  %v164 = vmul.f32 %v160, 0.01
  %v165 = vsel %vm163, %v160, %v164
  %v166 = vpack.c.bf16 %v165, %v165
  %v167 = vld [vmem:[%s5] sm:$0xf]
  %v168 = vld [vmem:[%s5 + $0x4] sm:$0xf]
  %v169 = vld [vmem:[%s5 + $0x8] sm:$0xf]
  %v170 = vld [vmem:[%s5 + $0xc] sm:$0xf]
  %v171 = vld [vmem:[%s5 + $0x10] sm:$0xf]
  %v172 = vld [vmem:[%s5 + $0x14] sm:$0xf]
  %v173 = vld [vmem:[%s5 + $0x18] sm:$0xf]
  %v174 = vld [vmem:[%s5 + $0x1c] sm:$0xf]
  %v175 = vld [vmem:[%s5 + $0x20] sm:$0xf]
  %v176 = vld [vmem:[%s5 + $0x24] sm:$0xf]
  %v177 = vld [vmem:[%s5 + $0x28] sm:$0xf]
  %v178 = vld [vmem:[%s5 + $0x2c] sm:$0xf]
  %v179 = vld [vmem:[%s5 + $0x30] sm:$0xf]
  %v180 = vld [vmem:[%s5 + $0x34] sm:$0xf]
  %v181 = vld [vmem:[%s5 + $0x38] sm:$0xf]
  %v182 = vld [vmem:[%s5 + $0x3c] sm:$0xf]
  %v183 = vld [vmem:[%s6] sm:$0x1]
  %v185 = vperm.slane %v183, 0
  %v203 = vunpack.c.l.b16 %v167
  %v204 = vunpack.c.l.b16 %v168
  %v205 = vunpack.c.l.b16 %v169
  %v206 = vunpack.c.l.b16 %v170
  %v207 = vunpack.c.l.b16 %v171
  %v208 = vunpack.c.l.b16 %v172
  %v209 = vunpack.c.l.b16 %v173
  %v210 = vunpack.c.l.b16 %v174
  %v211 = vunpack.c.l.b16 %v175
  %v212 = vunpack.c.l.b16 %v176
  %v213 = vunpack.c.l.b16 %v177
  %v214 = vunpack.c.l.b16 %v178
  %v215 = vunpack.c.l.b16 %v179
  %v216 = vunpack.c.l.b16 %v180
  %v217 = vunpack.c.l.b16 %v181
  %v218 = vunpack.c.l.b16 %v182
  %v219 = vpack.c.b16 %v204, %v203
  %v220 = vpack.c.b16 %v206, %v205
  %v221 = vpack.c.b16 %v208, %v207
  %v222 = vpack.c.b16 %v210, %v209
  %v223 = vpack.c.b16 %v212, %v211
  %v224 = vpack.c.b16 %v214, %v213
  %v225 = vpack.c.b16 %v216, %v215
  %v226 = vpack.c.b16 %v218, %v217
  %235 = vmatpush.bf16.msra.mxu0 %v226
  %236 = vmatpush.bf16.msra.mxu0 %v225
  %237 = vmatpush.bf16.msra.mxu0 %v224
  %238 = vmatpush.bf16.msra.mxu0 %v223
  %239 = vmatpush.bf16.msra.mxu0 %v222
  %240 = vmatpush.bf16.msra.mxu0 %v221
  %241 = vmatpush.bf16.msra.mxu0 %v220
  %242 = vmatpush.bf16.msra.mxu0 %v219
  %243 = vmatmul.bf16.gmra.mxu0 %v166
  %v244 = vpop.f32.mrf.mxu0
  %v245 = vadd.f32 %v185, %v244
  %v246 = vpop.f32.mrf.mxu0
  %247 = vdwg.mxu0
  %vm248 = vcmp.gt.f32.partialorder %v245, 0.0
  %v249 = vmul.f32 %v245, 0.01
  %v250 = vsel %vm248, %v245, %v249
  %v251 = vpack.c.bf16 %v250, %v250
  %v252 = vld [vmem:[%s7] sm:$0xf]
  %v253 = vld [vmem:[%s7 + $0x4] sm:$0xf]
  %v254 = vld [vmem:[%s7 + $0x8] sm:$0xf]
  %v255 = vld [vmem:[%s7 + $0xc] sm:$0xf]
  %v256 = vld [vmem:[%s7 + $0x10] sm:$0xf]
  %v257 = vld [vmem:[%s7 + $0x14] sm:$0xf]
  %v258 = vld [vmem:[%s7 + $0x18] sm:$0xf]
  %v259 = vld [vmem:[%s7 + $0x1c] sm:$0xf]
  %v260 = vld [vmem:[%s7 + $0x20] sm:$0xf]
  %v261 = vld [vmem:[%s7 + $0x24] sm:$0xf]
  %v262 = vld [vmem:[%s7 + $0x28] sm:$0xf]
  %v263 = vld [vmem:[%s7 + $0x2c] sm:$0xf]
  %v264 = vld [vmem:[%s7 + $0x30] sm:$0xf]
  %v265 = vld [vmem:[%s7 + $0x34] sm:$0xf]
  %v266 = vld [vmem:[%s7 + $0x38] sm:$0xf]
  %v267 = vld [vmem:[%s7 + $0x3c] sm:$0xf]
  %s268 = sld [smem:[#allocation2]]
  %v269 = vstv %s268
  %v286 = vunpack.c.l.b16 %v252
  %v287 = vunpack.c.l.b16 %v253
  %v288 = vunpack.c.l.b16 %v254
  %v289 = vunpack.c.l.b16 %v255
  %v290 = vunpack.c.l.b16 %v256
  %v291 = vunpack.c.l.b16 %v257
  %v292 = vunpack.c.l.b16 %v258
  %v293 = vunpack.c.l.b16 %v259
  %v294 = vunpack.c.l.b16 %v260
  %v295 = vunpack.c.l.b16 %v261
  %v296 = vunpack.c.l.b16 %v262
  %v297 = vunpack.c.l.b16 %v263
  %v298 = vunpack.c.l.b16 %v264
  %v299 = vunpack.c.l.b16 %v265
  %v300 = vunpack.c.l.b16 %v266
  %v301 = vunpack.c.l.b16 %v267
  %v302 = vpack.c.b16 %v287, %v286
  %v303 = vpack.c.b16 %v289, %v288
  %v304 = vpack.c.b16 %v291, %v290
  %v305 = vpack.c.b16 %v293, %v292
  %v306 = vpack.c.b16 %v295, %v294
  %v307 = vpack.c.b16 %v297, %v296
  %v308 = vpack.c.b16 %v299, %v298
  %v309 = vpack.c.b16 %v301, %v300
  %318 = vmatpush.bf16.msra.mxu0 %v309
  %319 = vmatpush.bf16.msra.mxu0 %v308
  %320 = vmatpush.bf16.msra.mxu0 %v307
  %321 = vmatpush.bf16.msra.mxu0 %v306
  %322 = vmatpush.bf16.msra.mxu0 %v305
  %323 = vmatpush.bf16.msra.mxu0 %v304
  %324 = vmatpush.bf16.msra.mxu0 %v303
  %325 = vmatpush.bf16.msra.mxu0 %v302
  %326 = vmatmul.bf16.gmra.mxu0 %v251
  %v327 = vpop.f32.mrf.mxu0
  %v328 = vadd.f32 %v269, %v327
  %v329 = vpop.f32.mrf.mxu0
  %330 = vdwg.mxu0
  %v331 = vxor.u32 %v328, 2147483648
  %v332 = vmul.f32 %v331, 1.442695
  %v333 = vpow.pop %v332
  %v334 = vadd.f32 %v333, 1.0
  %v335 = vrcp.pop %v334
  %v336 = vmul.f32 %v334, %v335
  %v337 = vsub.f32 1.0, %v336
  %v338 = vmul.f32 %v335, %v337
  %v339 = vadd.f32 %v335, %v338
  %vm340 = vweird.f32 %v334
  %vm341 = vweird.f32 %v335
  %vm342 = vmor %vm340, %vm341
  %v343 = vsel %vm342, %v335, %v339
  %v344 = vand.u32 2147483647, %v334
  %vm345 = vcmp.eq.f32.partialorder %v344, 8.507059e+37
  %v346 = vand.u32 %v334, 2147483648
  %v347 = vor.u32 1.1754944e-38, %v346
  %v348 = vsel %vm345, %v347, %v343
  %v349 = vmul.f32 1.0, %v348
  %v350 = vld [vmem:[%s8] sm:$0xf]
  %vm351 = vcmask 31744
  %v353 = vsel %vm351, %v349, 0
  %vm355 = vcmask 1043456
  %v357 = vsel %vm355, %v350, 0
  %359 = vmatpush.msra.mxu0 0.0
  %360 = vmatpush.msra.mxu0 0.0
  %361 = vmatpush.msra.mxu0 0.0
  %362 = vmatpush.msra.mxu0 0.0
  %363 = vmatpush.msra.mxu0 0.0
  %364 = vmatpush.msra.mxu0 0.0
  %365 = vmatpush.msra.mxu0 0.0
  %366 = vmatpush.msra.mxu0 0.0
  %367 = vmatpush.msra.mxu0 0.0
  %368 = vmatpush.msra.mxu0 0.0
  %369 = vmatpush.msra.mxu0 0.0
  %370 = vmatpush.msra.mxu0 0.0
  %371 = vmatpush.msra.mxu0 0.0
  %372 = vmatpush.msra.mxu0 0.0
  %373 = vmatpush.msra.mxu0 0.0
  %374 = vmatpush.msra.mxu0 %v357
  %375 = vmatmul.f32.gmra.mxu0 %v353
  %v376 = vpop.f32.mrf.mxu0
  %v377 = vadd.f32 0.0, %v376
  %378 = vdwg.mxu0
  %380 = vrot.lane.b32.xlu0 %v165, 64
  %v381 = vpop.permute.xlu0 %380
  %v383 = vsub.f32 %v165, %v381
  %v384 = vmul.f32 %v377, %v383
  %386 = vrot.lane.b32.xlu0 %v384, 64
  %v387 = vpop.permute.xlu0 %386
  %v389 = vadd.f32 %v165, %v387
  %391 = vrot.lane.b32.xlu0 %v389, 64
  %v392 = vpop.permute.xlu0 %391
  %vm394 = vcmask 523264
  %395 = vst.msk [vmem:[%s10] sm:$0xff] %vm394, %v392
  %396 = vst.msk [vmem:[%s11] sm:$0xff] %vm351, %v349
  // Predicated region
  $region42: #{concept_embedding_forward.1} parent=0 // pred_check
    _
  $region43: #{concept_embedding_forward.1} parent=0 // pred_check_branch
    %398 = sbr.rel (0) target = $region45
  $region44: #{concept_embedding_forward.1} parent=0 // pred_region
    _
  $region45: #{concept_embedding_forward.1} parent=0 // pred_fallthru
    _
  // Predicated region
  $region46: #{concept_embedding_forward.1} parent=0 // pred_check
    _
  $region47: #{concept_embedding_forward.1} parent=0 // pred_check_branch
    %400 = sbr.rel (0) target = $region49
  $region48: #{concept_embedding_forward.1} parent=0 // pred_region
    _
  $region49: #{concept_embedding_forward.1} parent=0 // pred_fallthru
    _
  // Predicated region
  $region50: #{concept_embedding_forward.1} parent=0 // pred_check
    _
  $region51: #{concept_embedding_forward.1} parent=0 // pred_check_branch
    %402 = sbr.rel (0) target = $region53
  $region52: #{concept_embedding_forward.1} parent=0 // pred_region
    _
  $region53: #{concept_embedding_forward.1} parent=0 // pred_fallthru
    _
  // Predicated region
  $region54: #{concept_embedding_forward.1} parent=0 // pred_check
    _
  $region55: #{concept_embedding_forward.1} parent=0 // pred_check_branch
    %404 = sbr.rel (0) target = $region57
  $region56: #{concept_embedding_forward.1} parent=0 // pred_region
    _
  $region57: #{concept_embedding_forward.1} parent=0 // pred_fallthru
    _

</llo_original>
